<compile_context>
chip_gen: v5e
topology: v5e:2x2
jax: 0.10.0
libtpu: 0.0.40
codegen_flags: <defaults>
</compile_context>

<pallas_src>
import functools

import jax
import jax.numpy as jnp
from jax.experimental import pallas as pl
from jax.experimental.pallas import tpu as pltpu


def _round_up(x, m):
    return ((x + m - 1) // m) * m


def _tpu_generation():
    """Best-effort (vmem_capacity_bytes, tensorcores_per_chip) of the local TPU."""
    vmem = 128 * 1024 * 1024
    cores = 1
    try:
        vmem = int(pltpu.get_tpu_info().vmem_capacity_bytes)
    except Exception:
        pass
    kind = ""
    try:
        kind = jax.devices()[0].device_kind.lower()
    except Exception:
        pass
    if ("v7" in kind) or ("7x" in kind):
        cores = 2
        vmem = min(vmem, 64 * 1024 * 1024)
    return vmem, cores


def _wcl_kernel(o1_ref, o2_ref, lab_ref, out_ref, acc_ref, *,
                temperature, pos_weight, neg_weight, n_valid, tn, n_red):
    r = pl.program_id(1)  # reduction ("arbitrary") axis, innermost

    # Per-row partial-loss accumulator for this "parallel" slice.
    @pl.when(r == 0)
    def _init():
        acc_ref[...] = jnp.zeros_like(acc_ref)

    o1 = o1_ref[...].astype(jnp.float32)          # (tn, D)
    o2 = o2_ref[...].astype(jnp.float32)          # (tn, D)
    lab = lab_ref[...].astype(jnp.float32)        # (tn, 1)

    # Fused cosine similarity of the two normalized embeddings:
    #   F.normalize(x) twice + CosineSimilarity == dot / (max(||a||,1e-12) *
    #   max(||b||,1e-12)).  An all-zero row gives dot == 0 -> cos == 0, which
    #   matches PyTorch (normalize(0)=0, CosineSimilarity clamps the denom).
    dot = jnp.sum(o1 * o2, axis=-1, keepdims=True)            # (tn, 1)
    n1 = jnp.maximum(jnp.sqrt(jnp.sum(o1 * o1, axis=-1, keepdims=True)), 1e-12)
    n2 = jnp.maximum(jnp.sqrt(jnp.sum(o2 * o2, axis=-1, keepdims=True)), 1e-12)

    # Temperature folded into the per-row reciprocal (cheap: (tn,1) only).
    # approx=False keeps full f32 accuracy (approx error could exceed 1e-5).
    sim = dot * pl.reciprocal(jnp.float32(temperature) * n1 * n2, approx=False)

    # weights = ones; overridden where label == 1 / label == 0 (exact PyTorch
    # semantics, including "other" label values keeping weight 1).
    w = jnp.where(lab == 1.0, jnp.float32(pos_weight),
                  jnp.where(lab == 0.0, jnp.float32(neg_weight),
                            jnp.float32(1.0)))

    # Numerically stable BCE-with-logits with a log1p tail:
    #   max(x, 0) - x*y + log1p(exp(-|x|))
    per = w * (jnp.maximum(sim, 0.0) - sim * lab +
               jnp.log1p(jnp.exp(-jnp.abs(sim))))              # (tn, 1)

    # Mask rows beyond N (ragged last block / overshoot tiles).  MUST stay a
    # select: garbage rows can be NaN/Inf and a multiply-mask would poison.
    tile_idx = pl.program_id(0) * n_red + r
    row_ids = tile_idx * tn + jax.lax.broadcasted_iota(jnp.int32, per.shape, 0)
    per = jnp.where(row_ids < n_valid, per, 0.0)

    acc_ref[...] += per

    # Hoisted finalize: single cross-sublane reduce + lane-dense store per
    # parallel slice instead of one per reduction step.
    @pl.when(r == n_red - 1)
    def _finalize():
        out_ref[...] = jnp.zeros_like(out_ref) + jnp.sum(acc_ref[...])


def weighted_contrastive_loss(output1, output2, label, *,
                              temperature=0.2, pos_weight=1.0, neg_weight=1.0,
                              block_rows=None, num_parallel=None):
    """output1, output2: (N, D) float (f32 or bf16); label: (N,) in {0, 1}."""
    n, d = output1.shape
    assert output2.shape == (n, d)

    in_item = jnp.dtype(output1.dtype).itemsize
    gran = 8 if in_item >= 4 else 16          # bf16 packs (16,128) per vreg

    vmem_phys, cores = _tpu_generation()
    # Leave headroom for compiler-internal scratch:
    #   v7x (64 MiB physical) -> ~48 MiB budget; v5e/v6e (128 MiB) -> ~96 MiB.
    vmem_cap = (48 * 1024 * 1024 if vmem_phys <= 64 * 1024 * 1024
                else int(0.75 * vmem_phys))

    # --- Adaptive row tile: ~2 MiB per input tile amortizes the ~0.35 us
    # per-grid-step overhead; never larger than the (rounded-up) row count.
    if block_rows is None:
        target_tile_bytes = 2 * 1024 * 1024
        tn = max(gran, (target_tile_bytes // (d * in_item) // gran) * gran)
    else:
        tn = max(gran, (int(block_rows) // gran) * gran)
    tn = min(tn, _round_up(n, gran))

    # --- VMEM need: up to triple-buffered inputs + f32 upcast temporaries +
    # lane-padded (tn,1) tiles (label buffers, scratch acc) + output.
    def need_bytes(rows):
        emb = 3 * 2 * rows * d * in_item
        upcast = (3 if in_item < 4 else 2) * rows * d * 4
        small = 4 * rows * 128 * 4 + 2 * 8 * 128 * 4
        return emb + upcast + small

    while need_bytes(tn) > int(0.9 * vmem_cap) and tn > gran:
        tn = max(gran, ((tn // 2) // gran) * gran)

    num_tiles = pl.cdiv(n, tn)

    # --- Megacore split: one "parallel" slice per TensorCore (2 on v7x,
    # 1 on v5e/v6e).  On v7x keep >=4 reduction steps per slice (shrink the
    # tile rather than collapsing the per-core DMA pipeline).
    n_par = cores if num_parallel is None else int(num_parallel)
    n_par = max(1, min(n_par, num_tiles))
    if block_rows is None and n_par > 1 and num_tiles < 4 * n_par:
        tn2 = max(gran, _round_up(pl.cdiv(n, 4 * n_par), gran))
        if tn2 < tn:
            tn = tn2
            num_tiles = pl.cdiv(n, tn)
            n_par = max(1, min(n_par, num_tiles))
    n_red = pl.cdiv(num_tiles, n_par)
    last_tile = num_tiles - 1

    vmem_limit = int(min(vmem_cap, max(2 * need_bytes(tn), 16 * 1024 * 1024)))

    # 3-deep input buffering only when tiles are forced small and there is a
    # real steady state to hide DMA issue latency in.
    deep_buffer = (n_red >= 3) and (tn * d * in_item < (1 << 20))

    lab2d = label.astype(jnp.float32).reshape(n, 1)

    kernel = functools.partial(
        _wcl_kernel,
        temperature=float(temperature),
        pos_weight=float(pos_weight),
        neg_weight=float(neg_weight),
        n_valid=int(n),
        tn=int(tn),
        n_red=int(n_red),
    )

    def row_map(p, r):
        # Clamp overshoot tiles (num_tiles < n_par * n_red) to a valid block;
        # the in-kernel row mask zeroes their contribution anyway.
        return (jnp.minimum(p * n_red + r, last_tile), 0)

    def emb_spec():
        if deep_buffer:
            try:
                return pl.BlockSpec((tn, d), row_map,
                                    pipeline_mode=pl.Buffered(3))
            except Exception:
                pass
        return pl.BlockSpec((tn, d), row_map)

    cost = pl.CostEstimate(
        flops=int(n) * (6 * int(d) + 16),
        transcendentals=5 * int(n),
        bytes_accessed=int(2 * n * d * in_item + n * 4 + n_par * 128 * 4),
    )

    partials = pl.pallas_call(
        kernel,
        out_shape=jax.ShapeDtypeStruct((1, n_par * 128), jnp.float32),
        grid=(n_par, n_red),
        in_specs=[
            emb_spec(),
            emb_spec(),
            pl.BlockSpec((tn, 1), row_map),
        ],
        out_specs=pl.BlockSpec((1, 128), lambda p, r: (0, p)),
        scratch_shapes=[pltpu.VMEM((tn, 1), jnp.float32)],
        compiler_params=pltpu.CompilerParams(
            dimension_semantics=("parallel", "arbitrary"),
            vmem_limit_bytes=vmem_limit,
        ),
        cost_estimate=cost,
    )(output1, output2, lab2d)

    # Sum the per-"parallel"-slice partials and divide by the *global* N.
    per_slice = partials.reshape(n_par, 128)[:, 0]
    return jnp.sum(per_slice) / jnp.float32(n)


def _reference(o1, o2, lab, temperature, pos_weight, neg_weight):
    """Pure-JAX mirror of the PyTorch forward (normalize twice, cosine, BCE)."""
    o1 = o1.astype(jnp.float32)
    o2 = o2.astype(jnp.float32)
    o1n = o1 / jnp.maximum(jnp.linalg.norm(o1, axis=1, keepdims=True), 1e-12)
    o2n = o2 / jnp.maximum(jnp.linalg.norm(o2, axis=1, keepdims=True), 1e-12)
    cos = jnp.sum(o1n * o2n, axis=-1) / (
        jnp.maximum(jnp.linalg.norm(o1n, axis=-1), 1e-8) *
        jnp.maximum(jnp.linalg.norm(o2n, axis=-1), 1e-8))
    sim = cos / temperature
    w = jnp.where(lab == 1.0, pos_weight, jnp.where(lab == 0.0, neg_weight, 1.0))
    per = jnp.maximum(sim, 0.0) - sim * lab + jnp.log1p(jnp.exp(-jnp.abs(sim)))
    return jnp.mean(w * per)


if __name__ == "__main__":
    key = jax.random.PRNGKey(0)
    ks = jax.random.split(key, 12)

    # Case 1: N not tile-aligned, a zero embedding row, explicit 2 parallel
    #         slices (tests the ragged-block mask + parallel partials).
    N1, D1 = 13, 64
    o1 = jax.random.normal(ks[0], (N1, D1), dtype=jnp.float32)
    o2 = jax.random.normal(ks[1], (N1, D1), dtype=jnp.float32)
    o1 = o1.at[0].set(0.0)  # zero-row edge case: cosine must be exactly 0
    lab = jax.random.bernoulli(ks[2], 0.5, (N1,)).astype(jnp.float32)
    got1 = weighted_contrastive_loss(o1, o2, lab, temperature=0.2,
                                     pos_weight=2.0, neg_weight=0.5,
                                     block_rows=8, num_parallel=2)
    jax.block_until_ready(got1)
    ref1 = _reference(o1, o2, lab, 0.2, 2.0, 0.5)
    assert jnp.allclose(got1, ref1, rtol=1e-5, atol=1e-5), (got1, ref1)

    # Case 2: multi-step reduction per parallel slice (n_red > 1), ragged last
    #         block, overshoot tile in the second slice.
    N2, D2 = 50, 128
    o1 = jax.random.normal(ks[3], (N2, D2), dtype=jnp.float32)
    o2 = jax.random.normal(ks[4], (N2, D2), dtype=jnp.float32)
    lab = jax.random.bernoulli(ks[5], 0.5, (N2,)).astype(jnp.float32)
    got2 = weighted_contrastive_loss(o1, o2, lab, temperature=0.2,
                                     pos_weight=3.0, neg_weight=1.0,
                                     block_rows=16, num_parallel=2)
    jax.block_until_ready(got2)
    ref2 = _reference(o1, o2, lab, 0.2, 3.0, 1.0)
    assert jnp.allclose(got2, ref2, rtol=1e-5, atol=1e-5), (got2, ref2)

    # Case 3: fully automatic tiling / parallelism (generation-aware defaults).
    N3, D3 = 8, 32
    o1 = jax.random.normal(ks[6], (N3, D3), dtype=jnp.float32)
    o2 = jax.random.normal(ks[7], (N3, D3), dtype=jnp.float32)
    lab = jax.random.bernoulli(ks[8], 0.5, (N3,)).astype(jnp.float32)
    got3 = weighted_contrastive_loss(o1, o2, lab, temperature=0.2,
                                     pos_weight=2.0, neg_weight=1.0)
    jax.block_until_ready(got3)
    ref3 = _reference(o1, o2, lab, 0.2, 2.0, 1.0)
    assert jnp.allclose(got3, ref3, rtol=1e-5, atol=1e-5), (got3, ref3)

    # Case 4: bf16 inputs (halved HBM traffic; per-tile f32 upcast in kernel).
    N4, D4 = 24, 64
    o1 = jax.random.normal(ks[9], (N4, D4), dtype=jnp.float32).astype(jnp.bfloat16)
    o2 = jax.random.normal(ks[10], (N4, D4), dtype=jnp.float32).astype(jnp.bfloat16)
    lab = jax.random.bernoulli(ks[11], 0.5, (N4,)).astype(jnp.float32)
    got4 = weighted_contrastive_loss(o1, o2, lab, temperature=0.2,
                                     pos_weight=1.5, neg_weight=0.75)
    jax.block_until_ready(got4)
    ref4 = _reference(o1, o2, lab, 0.2, 1.5, 0.75)
    assert jnp.allclose(got4, ref4, rtol=1e-4, atol=1e-4), (got4, ref4)

    print("KERNEL_OK")
</pallas_src>

<mosaic_0001>
module attributes {stable_mosaic.version = 11 : i64} {
  func.func @_wcl_kernel(%arg0: i32, %arg1: i32, %arg2: memref<8x64xf32, #tpu.memory_space<vmem>>, %arg3: memref<8x64xf32, #tpu.memory_space<vmem>>, %arg4: memref<8x1xf32, #tpu.memory_space<vmem>>, %arg5: memref<1x128xf32, #tpu.memory_space<vmem>>, %arg6: memref<8x1xf32, #tpu.memory_space<vmem>>) attributes {dimension_semantics = [#tpu.dimension_semantics<parallel>, #tpu.dimension_semantics<arbitrary>], iteration_bounds = array<i64: 2, 1>, scalar_prefetch = 0 : i64, scratch_operands = 1 : i64, tpu.core_type = #tpu.core_type<tc>, window_params = [{transform_indices = @transform_0, window_bounds = array<i64: 8, 64>}, {transform_indices = @transform_1, window_bounds = array<i64: 8, 64>}, {transform_indices = @transform_2, window_bounds = array<i64: 8, 1>}, {transform_indices = @transform_3, window_bounds = array<i64: 1, 128>}]} {
    %c0_i32 = arith.constant 0 : i32
    %0 = arith.cmpi eq, %arg1, %c0_i32 : i32
    %1 = arith.extui %0 : i1 to i32
    %c0_i32_0 = arith.constant 0 : i32
    %2 = arith.cmpi ne, %1, %c0_i32_0 : i32
    scf.if %2 {
      %cst_25 = arith.constant 0.000000e+00 : f32
      %62 = vector.broadcast %cst_25 : f32 to vector<8x1xf32>
      %c0_26 = arith.constant 0 : index
      %c0_27 = arith.constant 0 : index
      %63 = vector.load %arg6[%c0_26, %c0_27] : memref<8x1xf32, #tpu.memory_space<vmem>>, vector<8x1xf32>
      tpu.vector_store %arg6[%c0_26, %c0_27], %62 {strides = array<i32>} : memref<8x1xf32, #tpu.memory_space<vmem>>, vector<8x1xf32>,
    } else {
    }
    %c0 = arith.constant 0 : index
    %c0_1 = arith.constant 0 : index
    %3 = vector.load %arg2[%c0, %c0_1] : memref<8x64xf32, #tpu.memory_space<vmem>>, vector<8x64xf32>
    %c0_2 = arith.constant 0 : index
    %c0_3 = arith.constant 0 : index
    %4 = vector.load %arg3[%c0_2, %c0_3] : memref<8x64xf32, #tpu.memory_space<vmem>>, vector<8x64xf32>
    %c0_4 = arith.constant 0 : index
    %c0_5 = arith.constant 0 : index
    %5 = vector.load %arg4[%c0_4, %c0_5] : memref<8x1xf32, #tpu.memory_space<vmem>>, vector<8x1xf32>
    %6 = arith.mulf %3, %4 : vector<8x64xf32>
    %cst = arith.constant dense<0.000000e+00> : vector<8xf32>
    %7 = vector.multi_reduction <add>, %6, %cst [1] : vector<8x64xf32> to vector<8xf32>
    %8 = vector.shape_cast %7 : vector<8xf32> to vector<8x1xf32>
    %9 = arith.mulf %3, %3 : vector<8x64xf32>
    %cst_6 = arith.constant dense<0.000000e+00> : vector<8xf32>
    %10 = vector.multi_reduction <add>, %9, %cst_6 [1] : vector<8x64xf32> to vector<8xf32>
    %11 = vector.shape_cast %10 : vector<8xf32> to vector<8x1xf32>
    %12 = math.sqrt %11 : vector<8x1xf32>
    %cst_7 = arith.constant 9.99999996E-13 : f32
    %13 = vector.broadcast %cst_7 : f32 to vector<8x1xf32>
    %14 = arith.maximumf %12, %13 : vector<8x1xf32>
    %15 = arith.mulf %4, %4 : vector<8x64xf32>
    %cst_8 = arith.constant dense<0.000000e+00> : vector<8xf32>
    %16 = vector.multi_reduction <add>, %15, %cst_8 [1] : vector<8x64xf32> to vector<8xf32>
    %17 = vector.shape_cast %16 : vector<8xf32> to vector<8x1xf32>
    %18 = math.sqrt %17 : vector<8x1xf32>
    %cst_9 = arith.constant 9.99999996E-13 : f32
    %19 = vector.broadcast %cst_9 : f32 to vector<8x1xf32>
    %20 = arith.maximumf %18, %19 : vector<8x1xf32>
    %cst_10 = arith.constant 2.000000e-01 : f32
    %21 = vector.broadcast %cst_10 : f32 to vector<8x1xf32>
    %22 = arith.mulf %21, %14 : vector<8x1xf32>
    %23 = arith.mulf %22, %20 : vector<8x1xf32>
    %24 = tpu.reciprocal %23 : vector<8x1xf32> -> vector<8x1xf32>
    %25 = arith.mulf %8, %24 : vector<8x1xf32>
    %cst_11 = arith.constant 1.000000e+00 : f32
    %26 = vector.broadcast %cst_11 : f32 to vector<8x1xf32>
    %27 = arith.cmpf oeq, %5, %26 : vector<8x1xf32>
    %cst_12 = arith.constant 0.000000e+00 : f32
    %28 = vector.broadcast %cst_12 : f32 to vector<8x1xf32>
    %29 = arith.cmpf oeq, %5, %28 : vector<8x1xf32>
    %cst_13 = arith.constant 5.000000e-01 : f32
    %cst_14 = arith.constant 1.000000e+00 : f32
    %30 = vector.broadcast %cst_13 : f32 to vector<8x1xf32>
    %31 = vector.broadcast %cst_14 : f32 to vector<8x1xf32>
    %32 = arith.select %29, %30, %31 : vector<8x1xi1>, vector<8x1xf32>
    %cst_15 = arith.constant 2.000000e+00 : f32
    %33 = vector.broadcast %cst_15 : f32 to vector<8x1xf32>
    %34 = arith.select %27, %33, %32 : vector<8x1xi1>, vector<8x1xf32>
    %cst_16 = arith.constant 0.000000e+00 : f32
    %35 = vector.broadcast %cst_16 : f32 to vector<8x1xf32>
    %36 = arith.maximumf %25, %35 : vector<8x1xf32>
    %37 = arith.mulf %25, %5 : vector<8x1xf32>
    %38 = arith.subf %36, %37 : vector<8x1xf32>
    %39 = math.absf %25 : vector<8x1xf32>
    %cst_17 = arith.constant 0.000000e+00 : f32
    %40 = vector.broadcast %cst_17 : f32 to vector<8x1xf32>
    %41 = arith.subf %40, %39 : vector<8x1xf32>
    %42 = math.exp %41 : vector<8x1xf32>
    %43 = math.log1p %42 : vector<8x1xf32>
    %44 = arith.addf %38, %43 : vector<8x1xf32>
    %45 = arith.mulf %34, %44 : vector<8x1xf32>
    %c1_i32 = arith.constant 1 : i32
    %46 = arith.muli %arg0, %c1_i32 : i32
    %47 = arith.addi %46, %arg1 : i32
    %c8_i32 = arith.constant 8 : i32
    %48 = arith.muli %47, %c8_i32 : i32
    %49 = tpu.iota {dimensions = array<i32: 0>} : vector<8x1xi32>
    %50 = vector.broadcast %48 : i32 to vector<8x1xi32>
    %51 = arith.addi %50, %49 : vector<8x1xi32>
    %c13_i32 = arith.constant 13 : i32
    %52 = vector.broadcast %c13_i32 : i32 to vector<8x1xi32>
    %53 = arith.cmpi slt, %51, %52 : vector<8x1xi32>
    %cst_18 = arith.constant 0.000000e+00 : f32
    %54 = vector.broadcast %cst_18 : f32 to vector<8x1xf32>
    %55 = arith.select %53, %45, %54 : vector<8x1xi1>, vector<8x1xf32>
    %c0_19 = arith.constant 0 : index
    %c0_20 = arith.constant 0 : index
    %56 = vector.load %arg6[%c0_19, %c0_20] : memref<8x1xf32, #tpu.memory_space<vmem>>, vector<8x1xf32>
    %57 = arith.addf %56, %55 : vector<8x1xf32>
    %c0_21 = arith.constant 0 : index
    %c0_22 = arith.constant 0 : index
    %58 = vector.load %arg6[%c0_21, %c0_22] : memref<8x1xf32, #tpu.memory_space<vmem>>, vector<8x1xf32>
    tpu.vector_store %arg6[%c0_21, %c0_22], %57 {strides = array<i32>} : memref<8x1xf32, #tpu.memory_space<vmem>>, vector<8x1xf32>,
    %c0_i32_23 = arith.constant 0 : i32
    %59 = arith.cmpi eq, %arg1, %c0_i32_23 : i32
    %60 = arith.extui %59 : i1 to i32
    %c0_i32_24 = arith.constant 0 : i32
    %61 = arith.cmpi ne, %60, %c0_i32_24 : i32
    scf.if %61 {
      %cst_25 = arith.constant 0.000000e+00 : f32
      %62 = vector.broadcast %cst_25 : f32 to vector<1x128xf32>
      %c0_26 = arith.constant 0 : index
      %c0_27 = arith.constant 0 : index
      %63 = vector.load %arg6[%c0_26, %c0_27] : memref<8x1xf32, #tpu.memory_space<vmem>>, vector<8x1xf32>
      %64 = vector.shape_cast %63 : vector<8x1xf32> to vector<1x8x1xf32>
      %cst_28 = arith.constant dense<0.000000e+00> : vector<1xf32>
      %65 = vector.multi_reduction <add>, %64, %cst_28 [1, 2] : vector<1x8x1xf32> to vector<1xf32>
      %66 = vector.shape_cast %65 : vector<1xf32> to vector<1x1x1xf32>
      %67 = vector.extract %66[0, 0, 0] : f32 from vector<1x1x1xf32>
      %68 = vector.broadcast %67 : f32 to vector<1x128xf32>
      %69 = arith.addf %62, %68 : vector<1x128xf32>
      %c0_29 = arith.constant 0 : index
      %c0_30 = arith.constant 0 : index
      %70 = vector.load %arg5[%c0_29, %c0_30] : memref<1x128xf32, #tpu.memory_space<vmem>>, vector<1x128xf32>
      tpu.vector_store %arg5[%c0_29, %c0_30], %69 {strides = array<i32>} : memref<1x128xf32, #tpu.memory_space<vmem>>, vector<1x128xf32>,
    } else {
    }
    return
  }
  func.func @transform_0(%arg0: i32, %arg1: i32) -> (i32, i32) {
    %c1_i32 = arith.constant 1 : i32
    %0 = arith.muli %arg0, %c1_i32 : i32
    %1 = arith.addi %0, %arg1 : i32
    %c1_i32_0 = arith.constant 1 : i32
    %2 = arith.minsi %1, %c1_i32_0 : i32
    %c0_i32 = arith.constant 0 : i32
    %c0_i32_1 = arith.constant 0 : i32
    return %2, %c0_i32 : i32, i32
  }
  func.func @transform_1(%arg0: i32, %arg1: i32) -> (i32, i32) {
    %c1_i32 = arith.constant 1 : i32
    %0 = arith.muli %arg0, %c1_i32 : i32
    %1 = arith.addi %0, %arg1 : i32
    %c1_i32_0 = arith.constant 1 : i32
    %2 = arith.minsi %1, %c1_i32_0 : i32
    %c0_i32 = arith.constant 0 : i32
    %c0_i32_1 = arith.constant 0 : i32
    return %2, %c0_i32 : i32, i32
  }
  func.func @transform_2(%arg0: i32, %arg1: i32) -> (i32, i32) {
    %c1_i32 = arith.constant 1 : i32
    %0 = arith.muli %arg0, %c1_i32 : i32
    %1 = arith.addi %0, %arg1 : i32
    %c1_i32_0 = arith.constant 1 : i32
    %2 = arith.minsi %1, %c1_i32_0 : i32
    %c0_i32 = arith.constant 0 : i32
    %c0_i32_1 = arith.constant 0 : i32
    return %2, %c0_i32 : i32, i32
  }
  func.func @transform_3(%arg0: i32, %arg1: i32) -> (i32, i32) {
    %c0_i32 = arith.constant 0 : i32
    %c0_i32_0 = arith.constant 0 : i32
    return %c0_i32, %arg0 : i32, i32
  }
}

</mosaic_0001>

<llo_original>
// kernel: tpu_custom_call.1
$region0: #{tpu_custom_call.1}
  #allocation0 [shape = 'u32[]', space=smem, size = 0x4, offset = 0x4, fixed_abs, tag = 'smem constant byte address 0x4 - core index']
  #allocation1 [shape = 'u32[72,128]{1,0:T(1,128)}', space=vmem, size = 0x9000, scoped, tag = 'internal scratch']
  #allocation2 [shape = 'f32[8,1]{1,0:T(8,128)}', space=vmem, size = 0x1000, scoped, tag = 'scratch operand']
  %s0 = inlined_call_operand.vmem [shape: f32[13,64], index: 0, kind: input, shape index: {}]
  %s1 = inlined_call_operand.hbm [shape: f32[13,64], index: 1, kind: input, shape index: {}]
  %s2 = inlined_call_operand.vmem [shape: f32[13,1], index: 2, kind: input, shape index: {}]
  %s3 = inlined_call_operand.hbm [shape: f32[1,256], index: 3, kind: output, shape index: {}]
  %s4 = sld [smem:[#allocation0]]
  $region57: #{tpu_custom_call.1} parent=0
    _
  %s6 = ssub.s32 1, %s4
  %s7 = scalar_select 0, %s6, %s4
  $region1: #{tpu_custom_call.1} parent=0
    #allocation3 [shape = 'u8[8192]{0}', space=vmem, size = 0x2000, scoped, tag = 'input window, operand 1']
    #allocation4 [shape = 's32[2]{0}', space=sflag, size = 0x8, scoped, tag = 'scoped memory for tpu_custom_call.1']
    #allocation5 [shape = 's32[2]{0}', space=sflag, size = 0x8, scoped, tag = 'scoped memory for tpu_custom_call.1']
    #allocation6 [shape = 'u8[1024]{0}', space=vmem, size = 0x400, scoped, tag = 'output window, operand 0']
    %8 = vsyncpa [#allocation4], 0
    %s9 = scalar_lea.sflag [#allocation4], 1
    %10 = vsyncpa %s9, 0
    %11 = vsyncpa [#allocation5], 0
    %s12 = scalar_lea.sflag [#allocation5], 1
    %13 = vsyncpa %s12, 0
    loop: start=0, step=1, limit=4
    $region2: #{tpu_custom_call.1} parent=1 // loop_pre_header
      _
    $region3: #{tpu_custom_call.1} parent=1 // loop_header
      %s15 = sphi 0, %s19
      %p16 = scmp.ge.s32.totalorder %s15, 4
      %s22 = sphi 0, %s34
      %s23 = sphi 0, %s30
      %s24 = sphi 0, %s22
      %s25 = sphi 0, %s23
      %s26 = sphi 0, %s24
      %s27 = sphi 0, %s25
      %s43 = sphi 0, %s45
      %s46 = sphi 0, %s43
      %s47 = sphi 0, %s46
      %s63 = sphi 0, %s47
      %s75 = sphi 0, %s77
      %s78 = sphi 0, %s75
      %s79 = sphi 0, %s78
      %s95 = sphi 0, %s79
      %s107 = sphi 0, %s109
      %s110 = sphi 0, %s107
      %s111 = sphi 0, %s110
      %s127 = sphi 0, %s111
      %s133 = sphi 0, %s135
      %s136 = sphi 0, %s133
      %s137 = sphi 0, %s136
      %s153 = sphi 0, %s137
    $region4: #{tpu_custom_call.1} parent=1 // loop_header_branch
      %18 = sbr.rel (%p16) target = $region8
    $region5: #{tpu_custom_call.1} parent=1 // loop_body
      %s20 = ssub.s32 %s15, 1
      %s21 = ssub.s32 %s15, 2
      %s28 = sadd.s32 1, %s23
      %p29 = scmp.ge.s32.totalorder %s28, 1
      %s30 = scalar_select %p29, 0, %s28
      %s31 = sadd.s32 1, %s22
      %s32 = scalar_select %p29, %s31, %s22
      %p33 = scmp.ge.s32.totalorder %s32, 2
      %s34 = scalar_select %p33, 0, %s32
      %s35 = sadd.s32 %s22, %s23
      %p36 = scmp.lt.s32.totalorder %s35, 1
      %s37 = scalar_select %p36, %s35, 1
      %s38 = sadd.s32 %s34, %s30
      %p39 = scmp.lt.s32.totalorder %s38, 1
      %s40 = scalar_select %p39, %s38, 1
      %s41 = ssub.s32 %s37, %s40
      %p42 = scmp.eq.s32.totalorder %s41, 0
      %s44 = sadd.s32 %s43, 1
      %s45 = scalar_select %p42, %s43, %s44
      %p48 = pneg %p42
      %p49 = scmp.eq.s32.totalorder %s15, 1
      %p50 = por %p48, %p49
      %p51 = scmp.ne.s32.totalorder %s43, %s46
      %p52 = scmp.eq.s32.totalorder %s15, 0
      %p53 = por %p51, %p52
      %p54 = scmp.ne.s32.totalorder %s43, %s46
      %p55 = scmp.eq.s32.totalorder %s20, 1
      %p56 = por %p54, %p55
      %p57 = scmp.ne.s32.totalorder %s46, %s47
      %p58 = scmp.eq.s32.totalorder %s20, 0
      %p59 = por %p57, %p58
      %p60 = scmp.ne.s32.totalorder %s46, %s47
      %p61 = scmp.eq.s32.totalorder %s21, 1
      %p62 = por %p60, %p61
      %p64 = scmp.ne.s32.totalorder %s47, %s63
      %p65 = scmp.eq.s32.totalorder %s21, 0
      %p66 = por %p64, %p65
      %s67 = sadd.s32 %s22, %s23
      %p68 = scmp.lt.s32.totalorder %s67, 1
      %s69 = scalar_select %p68, %s67, 1
      %s70 = sadd.s32 %s34, %s30
      %p71 = scmp.lt.s32.totalorder %s70, 1
      %s72 = scalar_select %p71, %s70, 1
      %s73 = ssub.s32 %s69, %s72
      %p74 = scmp.eq.s32.totalorder %s73, 0
      %s76 = sadd.s32 %s75, 1
      %s77 = scalar_select %p74, %s75, %s76
      %p80 = pneg %p74
      %p81 = scmp.eq.s32.totalorder %s15, 1
      %p82 = por %p80, %p81
      %p83 = scmp.ne.s32.totalorder %s75, %s78
      %p84 = scmp.eq.s32.totalorder %s15, 0
      %p85 = por %p83, %p84
      %p86 = scmp.ne.s32.totalorder %s75, %s78
      %p87 = scmp.eq.s32.totalorder %s20, 1
      %p88 = por %p86, %p87
      %p89 = scmp.ne.s32.totalorder %s78, %s79
      %p90 = scmp.eq.s32.totalorder %s20, 0
      %p91 = por %p89, %p90
      %p92 = scmp.ne.s32.totalorder %s78, %s79
      %p93 = scmp.eq.s32.totalorder %s21, 1
      %p94 = por %p92, %p93
      %p96 = scmp.ne.s32.totalorder %s79, %s95
      %p97 = scmp.eq.s32.totalorder %s21, 0
      %p98 = por %p96, %p97
      %s99 = sadd.s32 %s22, %s23
      %p100 = scmp.lt.s32.totalorder %s99, 1
      %s101 = scalar_select %p100, %s99, 1
      %s102 = sadd.s32 %s34, %s30
      %p103 = scmp.lt.s32.totalorder %s102, 1
      %s104 = scalar_select %p103, %s102, 1
      %s105 = ssub.s32 %s101, %s104
      %p106 = scmp.eq.s32.totalorder %s105, 0
      %s108 = sadd.s32 %s107, 1
      %s109 = scalar_select %p106, %s107, %s108
      %p112 = pneg %p106
      %p113 = scmp.eq.s32.totalorder %s15, 1
      %p114 = por %p112, %p113
      %p115 = scmp.ne.s32.totalorder %s107, %s110
      %p116 = scmp.eq.s32.totalorder %s15, 0
      %p117 = por %p115, %p116
      %p118 = scmp.ne.s32.totalorder %s107, %s110
      %p119 = scmp.eq.s32.totalorder %s20, 1
      %p120 = por %p118, %p119
      %p121 = scmp.ne.s32.totalorder %s110, %s111
      %p122 = scmp.eq.s32.totalorder %s20, 0
      %p123 = por %p121, %p122
      %p124 = scmp.ne.s32.totalorder %s110, %s111
      %p125 = scmp.eq.s32.totalorder %s21, 1
      %p126 = por %p124, %p125
      %p128 = scmp.ne.s32.totalorder %s111, %s127
      %p129 = scmp.eq.s32.totalorder %s21, 0
      %p130 = por %p128, %p129
      %s131 = ssub.s32 %s22, %s34
      %p132 = scmp.eq.s32.totalorder %s131, 0
      %s134 = sadd.s32 %s133, 1
      %s135 = scalar_select %p132, %s133, %s134
      %p138 = pneg %p132
      %p139 = scmp.eq.s32.totalorder %s15, 1
      %p140 = por %p138, %p139
      %p141 = scmp.ne.s32.totalorder %s133, %s136
      %p142 = scmp.eq.s32.totalorder %s15, 0
      %p143 = por %p141, %p142
      %p144 = scmp.ne.s32.totalorder %s133, %s136
      %p145 = scmp.eq.s32.totalorder %s20, 1
      %p146 = por %p144, %p145
      %p147 = scmp.ne.s32.totalorder %s136, %s137
      %p148 = scmp.eq.s32.totalorder %s20, 0
      %p149 = por %p147, %p148
      %p150 = scmp.ne.s32.totalorder %s136, %s137
      %p151 = scmp.eq.s32.totalorder %s21, 1
      %p152 = por %p150, %p151
      %p154 = scmp.ne.s32.totalorder %s137, %s153
      %p155 = scmp.eq.s32.totalorder %s21, 0
      %p156 = por %p154, %p155
      %p157 = scmp.le.s32.totalorder 1, %s15
      %p158 = scmp.lt.s32.totalorder %s15, 3
      %p159 = pnand %p157, %p158
      %p160 = pneg %p159
      // Predicated region
      $region9: #{tpu_custom_call.1} parent=5 // pred_check
        _
      $region10: #{tpu_custom_call.1} parent=5 // pred_check_branch
        %162 = sbr.rel (%p159) target = $region12
      $region11: #{tpu_custom_call.1} parent=5 // pred_region
        %s163 = ssub.s32 %s15, 1
      $region12: #{tpu_custom_call.1} parent=5 // pred_fallthru
        _
      %p164 = scmp.lt.s32.totalorder %s15, 2
      // Predicated region
      $region13: #{tpu_custom_call.1} parent=5 // pred_check
        %p165 = pneg %p164
      $region14: #{tpu_custom_call.1} parent=5 // pred_check_branch
        %167 = sbr.rel (%p165) target = $region16
      $region15: #{tpu_custom_call.1} parent=5 // pred_region
        // Predicated region
        $region17: #{tpu_custom_call.1} parent=15 // pred_check
          %p168 = pneg %p53
        $region18: #{tpu_custom_call.1} parent=15 // pred_check_branch
          %170 = sbr.rel (%p168) target = $region20
        $region19: #{tpu_custom_call.1} parent=15 // pred_region
          %s171 = sadd.s32 %s22, %s23
          %p172 = scmp.lt.s32.totalorder %s171, 1
          %s173 = scalar_select %p172, %s171, 1
          %p174 = scmp.lt.s32.totalorder %s173, 1
          %s175 = scalar_select %p174, %s173, 1
          %s176 = smul.addr %s175, 8
          %s177 = scalar_lea.vmem %s0, %s176
          %s178 = sadd.s32 %s22, %s23
          %p179 = scmp.lt.s32.totalorder %s178, 1
          %s180 = scalar_select %p179, %s178, 1
        $region20: #{tpu_custom_call.1} parent=15 // pred_fallthru
          _
        // Predicated region
        $region21: #{tpu_custom_call.1} parent=15 // pred_check
          %p181 = pneg %p85
        $region22: #{tpu_custom_call.1} parent=15 // pred_check_branch
          %183 = sbr.rel (%p181) target = $region24
        $region23: #{tpu_custom_call.1} parent=15 // pred_region
          %s184 = sand.u32 %s75, 1
          %s185 = scalar_lea.sflag [#allocation4], %s184
          %s186 = sand.u32 %s75, 1
          %s187 = smul.addr %s186, 8
          %s188 = scalar_lea.vmem [#allocation3], %s187
          %s189 = sadd.s32 %s22, %s23
          %p190 = scmp.lt.s32.totalorder %s189, 1
          %s191 = scalar_select %p190, %s189, 1
          %193 = vsyncadd %s185, 0
          %s194 = smul.addr %s191, 8
          %s195 = scalar_lea.hbm %s1, %s194
          %s197 = sshll.u32 %s195, 4
          %s198 = int_to_ptr.hbm [resolvable:$true] %s197
          %s199 = sshll.u32 %s188, 4
          %s200 = int_to_ptr.vmem [resolvable:$true] %s199
          %202 = dma.hbm_to_vmem [thread:$0]  %s198, 128, %s200, %s185
        $region24: #{tpu_custom_call.1} parent=15 // pred_fallthru
          _
        // Predicated region
        $region25: #{tpu_custom_call.1} parent=15 // pred_check
          %p203 = pneg %p117
        $region26: #{tpu_custom_call.1} parent=15 // pred_check_branch
          %205 = sbr.rel (%p203) target = $region28
        $region27: #{tpu_custom_call.1} parent=15 // pred_region
          %s206 = sadd.s32 %s22, %s23
          %p207 = scmp.lt.s32.totalorder %s206, 1
          %s208 = scalar_select %p207, %s206, 1
          %p209 = scmp.lt.s32.totalorder %s208, 1
          %s210 = scalar_select %p209, %s208, 1
          %s211 = smul.addr %s210, 8
          %s212 = scalar_lea.vmem %s2, %s211
          %s213 = sadd.s32 %s22, %s23
          %p214 = scmp.lt.s32.totalorder %s213, 1
          %s215 = scalar_select %p214, %s213, 1
        $region28: #{tpu_custom_call.1} parent=15 // pred_fallthru
          _
      $region16: #{tpu_custom_call.1} parent=5 // pred_fallthru
        _
      %p216 = scmp.le.s32.totalorder 1, %s15
      %p217 = scmp.lt.s32.totalorder %s15, 3
      %p218 = pnand %p216, %p217
      %p219 = pneg %p218
      // Predicated region
      $region29: #{tpu_custom_call.1} parent=5 // pred_check
        _
      $region30: #{tpu_custom_call.1} parent=5 // pred_check_branch
        %221 = sbr.rel (%p218) target = $region32
      $region31: #{tpu_custom_call.1} parent=5 // pred_region
        %s222 = ssub.s32 %s15, 1
        %s223 = sand.u32 %s78, 1
        %s224 = scalar_lea.sflag [#allocation4], %s223
        %s225 = sand.u32 %s78, 1
        %s226 = smul.addr %s225, 8
        %s227 = scalar_lea.vmem [#allocation3], %s226
        // Predicated region
        $region33: #{tpu_custom_call.1} parent=31 // pred_check
          %p228 = pneg %p91
        $region34: #{tpu_custom_call.1} parent=31 // pred_check_branch
          %230 = sbr.rel (%p228) target = $region36
        $region35: #{tpu_custom_call.1} parent=31 // pred_region
          %232 = dma.done %s224, 128
        $region36: #{tpu_custom_call.1} parent=31 // pred_fallthru
          _
        %s233 = sadd.s32 %s24, %s25
        %p234 = scmp.lt.s32.totalorder %s233, 1
        %s235 = scalar_select %p234, %s233, 1
        %p236 = scmp.lt.s32.totalorder %s235, 1
        %s237 = scalar_select %p236, %s235, 1
        %s238 = smul.addr %s237, 8
        %s239 = scalar_lea.vmem %s0, %s238
        %p240 = pneg %p59
        %p241 = pneg %p56
        %s242 = sand.u32 %s78, 1
        %s243 = scalar_lea.sflag [#allocation4], %s242
        %s244 = sand.u32 %s78, 1
        %s245 = smul.addr %s244, 8
        %s246 = scalar_lea.vmem [#allocation3], %s245
        %p247 = pneg %p91
        %p248 = pneg %p88
        %s249 = sadd.s32 %s24, %s25
        %p250 = scmp.lt.s32.totalorder %s249, 1
        %s251 = scalar_select %p250, %s249, 1
        %p252 = scmp.lt.s32.totalorder %s251, 1
        %s253 = scalar_select %p252, %s251, 1
        %s254 = smul.addr %s253, 8
        %s255 = scalar_lea.vmem %s2, %s254
        %p256 = pneg %p123
        %p257 = pneg %p120
        %p258 = pneg %p149
        %p259 = pneg %p146
        %s260 = sand.u32 %s136, 1
        %s261 = scalar_lea.sflag [#allocation5], %s260
        %s262 = sand.u32 %s136, 1
        %s263 = scalar_lea.vmem [#allocation6], %s262
        %s264 = sadd.s32 %s24, %s25
        %p265 = scmp.lt.s32.totalorder %s264, 1
        %s266 = scalar_select %p265, %s264, 1
        %p267 = scmp.lt.s32.totalorder %s266, 1
        %s268 = scalar_select %p267, %s266, 1
        %s269 = smul.addr %s268, 8
        %s270 = scalar_lea.vmem %s0, %s269
        %s271 = sadd.s32 %s24, %s25
        %p272 = scmp.lt.s32.totalorder %s271, 1
        %s273 = scalar_select %p272, %s271, 1
        %s274 = sadd.s32 %s24, %s25
        %p275 = scmp.lt.s32.totalorder %s274, 1
        %s276 = scalar_select %p275, %s274, 1
        %s277 = sadd.s32 %s24, %s25
        %p278 = scmp.lt.s32.totalorder %s277, 1
        %s279 = scalar_select %p278, %s277, 1
        %p280 = scmp.lt.s32.totalorder %s279, 1
        %s281 = scalar_select %p280, %s279, 1
        %s282 = smul.addr %s281, 8
        %s283 = scalar_lea.vmem %s2, %s282
        %s284 = sadd.s32 %s24, %s25
        %p285 = scmp.lt.s32.totalorder %s284, 1
        %s286 = scalar_select %p285, %s284, 1
        %p287 = scmp.eq.s32.totalorder %s25, 0
        // Predicated region
        $region37: #{tpu_custom_call.1} parent=31 // pred_check
          %p288 = pneg %p287
        $region38: #{tpu_custom_call.1} parent=31 // pred_check_branch
          %290 = sbr.rel (%p288) target = $region40
        $region39: #{tpu_custom_call.1} parent=31 // pred_region
          %vm291 = vcmask 7168
          %292 = vst.msk [vmem:[#allocation2] sm:$0xff] %vm291, 0.0
        $region40: #{tpu_custom_call.1} parent=31 // pred_fallthru
          _
        %v293 = vld [vmem:[%s270] sm:$0xff]
        %v294 = vld [vmem:[%s227] sm:$0xff]
        %v295 = vld [vmem:[%s283] sm:$0xff]
        %v296 = vmul.f32 %v293, %v294
        %vm297 = vcmask 523264
        %v298 = vsel %vm297, %v296, 0.0
        %299 = vadd.xlane.f32.xlu0 %v298
        %v300 = vpop.xlane.xlu0 %299
        %v301 = vmul.f32 %v293, %v293
        %v302 = vsel %vm297, %v301, 0.0
        %303 = vadd.xlane.f32.xlu0 %v302
        %v304 = vpop.xlane.xlu0 %303
        %v305 = vrsqrt.pop %v304
        %v306 = vmul.f32 %v305, %v304
        %v307 = vmul.f32 %v306, %v305
        %v308 = vmul.f32 0.5, %v307
        %v309 = vsub.f32 1.5, %v308
        %v310 = vmul.f32 %v305, %v309
        %v311 = vmul.f32 %v304, %v310
        %vm312 = vcmp.eq.f32.partialorder %v304, inf
        %v313 = vsel %vm312, %v304, %v311
        %vm314 = vcmp.eq.f32.partialorder %v304, 0.0
        %v315 = vand.u32 %v304, 2147483648
        %v316 = vsel %vm314, %v315, %v313
        %v317 = vmax.f32 %v316, 1e-12
        %v318 = vmul.f32 %v294, %v294
        %v319 = vsel %vm297, %v318, 0.0
        %320 = vadd.xlane.f32.xlu0 %v319
        %v321 = vpop.xlane.xlu0 %320
        %v322 = vrsqrt.pop %v321
        %v323 = vmul.f32 %v322, %v321
        %v324 = vmul.f32 %v323, %v322
        %v325 = vmul.f32 0.5, %v324
        %v326 = vsub.f32 1.5, %v325
        %v327 = vmul.f32 %v322, %v326
        %v328 = vmul.f32 %v321, %v327
        %vm329 = vcmp.eq.f32.partialorder %v321, inf
        %v330 = vsel %vm329, %v321, %v328
        %vm331 = vcmp.eq.f32.partialorder %v321, 0.0
        %v332 = vand.u32 %v321, 2147483648
        %v333 = vsel %vm331, %v332, %v330
        %v334 = vmax.f32 %v333, 1e-12
        %v335 = vmul.f32 %v317, 0.2
        %v336 = vmul.f32 %v335, %v334
        %v337 = vrcp.pop %v336
        %v338 = vmul.f32 %v336, %v337
        %v339 = vsub.f32 1.0, %v338
        %v340 = vmul.f32 %v337, %v339
        %v341 = vadd.f32 %v337, %v340
        %vm342 = vweird.f32 %v336
        %vm343 = vweird.f32 %v337
        %vm344 = vmor %vm342, %vm343
        %v345 = vsel %vm344, %v337, %v341
        %v346 = vand.u32 2147483647, %v336
        %vm347 = vcmp.eq.f32.partialorder %v346, 8.507059e+37
        %v348 = vand.u32 %v336, 2147483648
        %v349 = vor.u32 1.1754944e-38, %v348
        %v350 = vsel %vm347, %v349, %v345
        %v351 = vmul.f32 %v300, %v350
        %vm352 = vcmp.eq.f32.partialorder %v295, 1.0
        %vm353 = vcmp.eq.f32.partialorder %v295, 0.0
        %v354 = vsel %vm353, 0.5, 1.0
        %v355 = vsel %vm352, 2.0, %v354
        %v356 = vmax.f32 %v351, 0.0
        %v357 = vmul.f32 %v351, %v295
        %v358 = vsub.f32 %v356, %v357
        %v359 = vand.u32 2147483647, %v351
        %v360 = vsub.f32 0.0, %v359
        %v361 = vmul.f32 %v360, 1.442695
        %v362 = vpow.pop %v361
        %v363 = vadd.f32 %v362, 1.0
        %v364 = vlog2.pop %v363
        %v365 = vmul.f32 %v364, 0.6931472
        %v366 = vmul.f32 -0.5, %v362
        %v367 = vadd.f32 %v366, 1.0
        %v368 = vmul.f32 %v367, %v362
        %v369 = vand.u32 2147483647, %v362
        %vm370 = vcmp.lt.f32.partialorder %v369, 0.0004427343
        %v371 = vsel %vm370, %v368, %v365
        %v372 = vadd.f32 %v358, %v371
        %v373 = vmul.f32 %v355, %v372
        %s374 = sadd.s32 %s24, %s25
        %s375 = smul.u32 %s374, 8
        %v376 = vlaneseq
        %v377 = vshrl.u32 %v376, 7
        %v378 = vstv %s375
        %v379 = vadd.s32 %v378, %v377
        %vm380 = vcmp.lt.s32.totalorder %v379, 13
        %v381 = vsel %vm380, %v373, 0.0
        %v382 = vld [vmem:[#allocation2] sm:$0xff]
        %v383 = vadd.f32 %v382, %v381
        %vm384 = vcmask 7168
        %385 = vst.msk [vmem:[#allocation2] sm:$0xff] %vm384, %v383
        // Predicated region
        $region41: #{tpu_custom_call.1} parent=31 // pred_check
          %p386 = pneg %p287
        $region42: #{tpu_custom_call.1} parent=31 // pred_check_branch
          %388 = sbr.rel (%p386) target = $region44
        $region43: #{tpu_custom_call.1} parent=31 // pred_region
          %v389 = vld [vmem:[#allocation2] sm:$0xff]
          %v390 = vsel %vm384, %v389, 0.0
          %391 = vadd.xlane.f32.xlu0 %v390
          %v392 = vpop.xlane.xlu0 %391
          %v393 = vrot.slane %v392, 4
          %v394 = vadd.f32 %v392, %v393
          %v395 = vrot.slane %v394, 2
          %v396 = vadd.f32 %v394, %v395
          %v397 = vrot.slane %v396, 1
          %v398 = vadd.f32 %v396, %v397
          %s399 = vtos %v398
          %v400 = vstv %s399
          %v401 = vadd.f32 %v400, 0.0
          %402 = vst [vmem:[%s263] sm:$0x1] %v401
        $region44: #{tpu_custom_call.1} parent=31 // pred_fallthru
          _
        %s403 = sand.u32 %s136, 1
        %s404 = scalar_lea.sflag [#allocation5], %s403
        %s405 = sand.u32 %s136, 1
        %s406 = scalar_lea.vmem [#allocation6], %s405
        // Predicated region
        $region45: #{tpu_custom_call.1} parent=31 // pred_check
          %p407 = pneg %p146
        $region46: #{tpu_custom_call.1} parent=31 // pred_check_branch
          %409 = sbr.rel (%p407) target = $region48
        $region47: #{tpu_custom_call.1} parent=31 // pred_region
          %411 = vsyncadd %s404, 0
          %s412 = scalar_lea.hbm %s3, %s24
          %s414 = sshll.u32 %s406, 4
          %s415 = int_to_ptr.vmem [resolvable:$true] %s414
          %s416 = sshll.u32 %s412, 4
          %s417 = int_to_ptr.hbm [resolvable:$true] %s416
          %419 = dma.vmem_to_hbm [thread:$0]  %s415, 16, %s417, %s404
        $region48: #{tpu_custom_call.1} parent=31 // pred_fallthru
          _
      $region32: #{tpu_custom_call.1} parent=5 // pred_fallthru
        _
      %p420 = scmp.le.s32.totalorder 2, %s15
      // Predicated region
      $region49: #{tpu_custom_call.1} parent=5 // pred_check
        %p421 = pneg %p420
      $region50: #{tpu_custom_call.1} parent=5 // pred_check_branch
        %423 = sbr.rel (%p421) target = $region52
      $region51: #{tpu_custom_call.1} parent=5 // pred_region
        %s424 = ssub.s32 %s15, 2
        // Predicated region
        $region53: #{tpu_custom_call.1} parent=51 // pred_check
          %p425 = pneg %p152
        $region54: #{tpu_custom_call.1} parent=51 // pred_check_branch
          %427 = sbr.rel (%p425) target = $region56
        $region55: #{tpu_custom_call.1} parent=51 // pred_region
          %s428 = sand.u32 %s137, 1
          %s429 = scalar_lea.sflag [#allocation5], %s428
          %s430 = sand.u32 %s137, 1
          %s431 = scalar_lea.vmem [#allocation6], %s430
          %433 = dma.done %s429, 16
        $region56: #{tpu_custom_call.1} parent=51 // pred_fallthru
          _
      $region52: #{tpu_custom_call.1} parent=5 // pred_fallthru
        _
    $region6: #{tpu_custom_call.1} parent=1 // loop_footer
      %s19 = sadd.s32 1, %s15
    $region7: #{tpu_custom_call.1} parent=1 // loop_footer_branch
      %14 = sbr.rel target = $region3
    $region8: #{tpu_custom_call.1} parent=1 // loop_exit
      _
    %434 = vsyncpa [#allocation4], 1
    %s435 = scalar_lea.sflag [#allocation4], 1
    %436 = vsyncpa %s435, 1
    %437 = vsyncpa [#allocation5], 1
    %s438 = scalar_lea.sflag [#allocation5], 1
    %439 = vsyncpa %s438, 1

</llo_original>
